<compile_context>
chip_gen: v7x
topology: tpu7x:2x2x1
jax: 0.10.0
libtpu: 0.0.40
codegen_flags: <defaults>
</compile_context>

<pallas_src>
import math

import jax
import jax.numpy as jnp
from jax.experimental import pallas as pl
from jax.experimental.pallas import tpu as pltpu


def _repeat_embedding_kernel(idx_ref, x_ref, emb_ref, o_ref):
    # idx_ref : SMEM (1,) int32  -- scalar-prefetched rep_idx; consumed by the
    #           embedding BlockSpec index_map, not read in the body.
    # x_ref   : VMEM (TB, Lc)    -- sublane-dense chunk of flattened x
    # emb_ref : VMEM (1, 1, Lc)  -- ONLY the routed embedding row, Lc-tiled
    # o_ref   : VMEM (TB, Lc)
    del idx_ref
    row = emb_ref[0]  # (1, Lc), static index -> no dynamic VMEM slice
    o_ref[...] = (x_ref[...].astype(jnp.float32)
                  + row.astype(jnp.float32)).astype(o_ref.dtype)


def repeat_embedding(rep_idx, x, emb_weight, *, force_kernel=False):
    """RepeatEmbedding forward: y = x + emb_weight[rep_idx].  x: (B, S, D)."""
    B, S, D = x.shape
    R = emb_weight.shape[0]
    itemsize = jnp.dtype(x.dtype).itemsize
    n_elems = B * S * D

    # Clamp the routed index: VMEM/DMA indexing is not bounds-checked.
    idx = jnp.clip(jnp.asarray(rep_idx, jnp.int32).reshape(()), 0, R - 1)

    # Lane-dense replication width: smallest common multiple of D and 128, so
    # one Lc-tiled embedding row lines up with every Lc-wide chunk of flat x.
    lc = D * (128 // math.gcd(D, 128))  # lcm(D, 128)

    # Tiny inputs (or a degenerate Lc) are strictly faster as a fused XLA add.
    if ((not force_kernel and n_elems * itemsize < (1 << 20))
            or lc * 8 * itemsize > (8 << 20)):
        row = jnp.take(emb_weight, idx, axis=0).astype(x.dtype)
        return x + row[None, None, :]

    # Rows per grid step: sublane-dense (multiple of 8), ~2 MiB per x block so
    # double-buffered in+out blocks (~8 MiB) fit v5e's 16 MiB scoped-VMEM
    # default as well as v6e/v7x's 32 MiB.
    target_block_bytes = 2 << 20
    tb = (target_block_bytes // (lc * itemsize)) // 8 * 8
    tb = int(max(8, min(1024, tb)))
    rows = -(-n_elems // lc)                          # ceil
    tb = min(tb, max(8, ((rows + 7) // 8) * 8))       # don't over-allocate small inputs
    n_steps = -(-rows // tb)
    rows_padded = n_steps * tb

    # Wrapper-side layout plumbing: flatten to (rows_padded, Lc); pad the tail
    # so every grid step is a full, unmasked (TB, Lc) block.
    x_flat = x.reshape(-1)
    pad = rows_padded * lc - n_elems
    if pad:
        x_flat = jnp.pad(x_flat, (0, pad))
    x2d = x_flat.reshape(rows_padded, lc)

    # Embedding table tiled to Lc lanes (independent of S): (R, 1, Lc).
    emb_tiled = jnp.tile(emb_weight, (1, lc // D)).reshape(R, 1, lc)

    idx_arr = idx.reshape((1,))

    out2d = pl.pallas_call(
        _repeat_embedding_kernel,
        out_shape=jax.ShapeDtypeStruct((rows_padded, lc), x.dtype),
        grid_spec=pltpu.PrefetchScalarGridSpec(
            num_scalar_prefetch=1,                    # rep_idx -> SMEM before grid
            grid=(n_steps,),
            in_specs=[
                # sublane-dense chunk of x per step
                pl.BlockSpec((tb, lc), lambda i, idx_ref: (i, 0)),
                # only the routed embedding row; grid-invariant -> fetched once
                pl.BlockSpec((1, 1, lc), lambda i, idx_ref: (idx_ref[0], 0, 0)),
            ],
            out_specs=pl.BlockSpec((tb, lc), lambda i, idx_ref: (i, 0)),
        ),
        compiler_params=pltpu.CompilerParams(
            dimension_semantics=("parallel",),        # megacore shards row-chunks
            vmem_limit_bytes=32 * 1024 * 1024,
        ),
    )(idx_arr, x2d, emb_tiled)

    return out2d.reshape(-1)[:n_elems].reshape(B, S, D)


if __name__ == "__main__":
    B, S, D = 2, 8, 32
    N_REPEATS = 4
    REP_IDX = 2

    key = jax.random.PRNGKey(0)
    kx, ke = jax.random.split(key)
    x = jax.random.normal(kx, (B, S, D), jnp.float32)
    emb_weight = jax.random.normal(ke, (N_REPEATS, D), jnp.float32) * 0.02

    # Force the Pallas path even at this tiny test size (the wrapper otherwise
    # short-circuits sub-MiB inputs to plain XLA).
    y = repeat_embedding(REP_IDX, x, emb_weight, force_kernel=True)
    jax.block_until_ready(y)

    # Pure-JAX reference:  x + emb.weight[rep_idx]  (broadcast over B and S).
    y_ref = x + emb_weight[REP_IDX][None, None, :]
    err = float(jnp.max(jnp.abs(y - y_ref)))
    assert jnp.allclose(y, y_ref, atol=1e-6, rtol=1e-6), f"max abs err = {err}"

    print("KERNEL_OK")
</pallas_src>

<mosaic_0001>
module attributes {stable_mosaic.version = 11 : i64} {
  func.func @_repeat_embedding_kernel(%arg0: i32, %arg1: memref<1xi32, #tpu.memory_space<smem>>, %arg2: memref<8x128xf32, #tpu.memory_space<vmem>>, %arg3: memref<1x1x128xf32, #tpu.memory_space<vmem>>, %arg4: memref<8x128xf32, #tpu.memory_space<vmem>>) attributes {dimension_semantics = [#tpu.dimension_semantics<parallel>], iteration_bounds = array<i64: 1>, scalar_prefetch = 1 : i64, scratch_operands = 0 : i64, tpu.core_type = #tpu.core_type<tc>, window_params = [{transform_indices = @transform_0, window_bounds = array<i64: 8, 128>}, {transform_indices = @transform_1, window_bounds = array<i64: 1, 1, 128>}, {transform_indices = @transform_2, window_bounds = array<i64: 8, 128>}]} {
    %c0 = arith.constant 0 : index
    %c0_0 = arith.constant 0 : index
    %c0_1 = arith.constant 0 : index
    %0 = vector.load %arg3[%c0, %c0_0, %c0_1] : memref<1x1x128xf32, #tpu.memory_space<vmem>>, vector<1x1x128xf32>
    %1 = vector.shape_cast %0 : vector<1x1x128xf32> to vector<1x128xf32>
    %c0_2 = arith.constant 0 : index
    %c0_3 = arith.constant 0 : index
    %2 = vector.load %arg2[%c0_2, %c0_3] : memref<8x128xf32, #tpu.memory_space<vmem>>, vector<8x128xf32>
    %3 = vector.broadcast %1 : vector<1x128xf32> to vector<8x128xf32>
    %4 = arith.addf %2, %3 : vector<8x128xf32>
    %c0_4 = arith.constant 0 : index
    %c0_5 = arith.constant 0 : index
    %5 = vector.load %arg4[%c0_4, %c0_5] : memref<8x128xf32, #tpu.memory_space<vmem>>, vector<8x128xf32>
    tpu.vector_store %arg4[%c0_4, %c0_5], %4 {strides = array<i32>} : memref<8x128xf32, #tpu.memory_space<vmem>>, vector<8x128xf32>,
    return
  }
  func.func @transform_0(%arg0: i32, %arg1: memref<1xi32, #tpu.memory_space<smem>>) -> (i32, i32) {
    %c0_i32 = arith.constant 0 : i32
    %c0_i32_0 = arith.constant 0 : i32
    return %arg0, %c0_i32 : i32, i32
  }
  func.func @transform_1(%arg0: i32, %arg1: memref<1xi32, #tpu.memory_space<smem>>) -> (i32, i32, i32) {
    %c0 = arith.constant 0 : index
    %0 = memref.load %arg1[%c0] : memref<1xi32, #tpu.memory_space<smem>>
    %c0_i32 = arith.constant 0 : i32
    %c0_i32_0 = arith.constant 0 : i32
    %c0_i32_1 = arith.constant 0 : i32
    return %0, %c0_i32, %c0_i32_0 : i32, i32, i32
  }
  func.func @transform_2(%arg0: i32, %arg1: memref<1xi32, #tpu.memory_space<smem>>) -> (i32, i32) {
    %c0_i32 = arith.constant 0 : i32
    %c0_i32_0 = arith.constant 0 : i32
    return %arg0, %c0_i32 : i32, i32
  }
}

</mosaic_0001>

<llo_original>
// kernel: tpu_custom_call.1
$region0: #{tpu_custom_call.1}
  #allocation0 [shape = 'u32[]', space=smem, size = 0x4, offset = 0x4, fixed_abs, tag = 'smem constant byte address 0x4 - core index']
  #allocation1 [shape = 'u32[144,128]{1,0:T(1,128)}', space=vmem, size = 0x12000, scoped, tag = 'internal scratch']
  #allocation2 [shape = 's32[1]{0}', space=sflag, size = 0x4, scoped, tag = 'scoped memory for tpu_custom_call.1']
  #allocation3 [shape = 's32[1]{0:T(128)S(6)}', space=smem, size = 0x200, scoped, tag = 'prefetched SMEM operand 0']
  %s0 = inlined_call_operand.<no memory space> [shape: s32[1], index: 0, kind: input, shape index: {}]
  %s1 = inlined_call_operand.hbm [shape: f32[8,128], index: 1, kind: input, shape index: {}]
  %s2 = inlined_call_operand.vmem [shape: f32[4,1,128], index: 2, kind: input, shape index: {}]
  %s3 = inlined_call_operand.hbm [shape: f32[8,128], index: 3, kind: output, shape index: {}]
  %s4 = sld [smem:[#allocation0]]
  $region22: #{tpu_custom_call.1} parent=0
    _
  %s6 = ssub.s32 1, %s4
  %s7 = scalar_select 0, %s6, %s4
  %8 = sst [smem:[#allocation3]] %s0
  $region1: #{tpu_custom_call.1} parent=0
    #allocation4 [shape = 'u8[4096]{0}', space=vmem, size = 0x1000, scoped, tag = 'input window, operand 1, single buffered']
    #allocation5 [shape = 's32[1]{0}', space=sflag, size = 0x4, scoped, tag = 'scoped memory for tpu_custom_call.1']
    #allocation6 [shape = 's32[1]{0}', space=sflag, size = 0x4, scoped, tag = 'scoped memory for tpu_custom_call.1']
    #allocation7 [shape = 'u8[4096]{0}', space=vmem, size = 0x1000, scoped, tag = 'output window, operand 0, single buffered']
    %9 = vsyncpa [#allocation5], 0
    %10 = vsyncpa [#allocation6], 0
    // Predicated region
    $region2: #{tpu_custom_call.1} parent=1 // pred_check
      _
    $region3: #{tpu_custom_call.1} parent=1 // pred_check_branch
      %12 = sbr.rel (0) target = $region5
    $region4: #{tpu_custom_call.1} parent=1 // pred_region
      %s14 = ssub.s32 128, 128
      %15 = vsyncadd [#allocation5], %s14
      %s17 = sshll.u32 [#allocation4], 4
      %s18 = int_to_ptr.vmem [resolvable:$true] %s17
      %20 = dma.hbm_to_vmem [thread:$0]  %s1, 128, %s18, [#allocation5]
    $region5: #{tpu_custom_call.1} parent=1 // pred_fallthru
      _
    // Predicated region
    $region6: #{tpu_custom_call.1} parent=1 // pred_check
      _
    $region7: #{tpu_custom_call.1} parent=1 // pred_check_branch
      %22 = sbr.rel (0) target = $region9
    $region8: #{tpu_custom_call.1} parent=1 // pred_region
      %s23 = sld [smem:[#allocation3]]
      %p24 = scmp.lt.s32.totalorder %s23, 3
      %s25 = scalar_select %p24, %s23, 3
      %s26 = scalar_lea.vmem %s2, %s25
      %s27 = sld [smem:[#allocation3]]
    $region9: #{tpu_custom_call.1} parent=1 // pred_fallthru
      _
    // Predicated region
    $region10: #{tpu_custom_call.1} parent=1 // pred_check
      _
    $region11: #{tpu_custom_call.1} parent=1 // pred_check_branch
      %29 = sbr.rel (0) target = $region13
    $region12: #{tpu_custom_call.1} parent=1 // pred_region
      %30 = dma.done [#allocation5], 128
    $region13: #{tpu_custom_call.1} parent=1 // pred_fallthru
      _
    %s31 = sld [smem:[#allocation3]]
    %p32 = scmp.lt.s32.totalorder %s31, 3
    %s33 = scalar_select %p32, %s31, 3
    %s34 = scalar_lea.vmem %s2, %s33
    %s35 = sld [smem:[#allocation3]]
    %p36 = scmp.lt.s32.totalorder %s35, 3
    %s37 = scalar_select %p36, %s35, 3
    %s38 = scalar_lea.vmem %s2, %s37
    %s39 = sld [smem:[#allocation3]]
    %v40 = vld [vmem:[%s38] sm:$0x1]
    %v41 = vld [vmem:[#allocation4] sm:$0xff]
    %v43 = vlaneseq
    %v44 = vshrl.u32 %v43, 7
    %v45 = vsub.s32 0, %v44
    %v46 = vrot.slane %v40, %v45
    %v48 = vadd.f32 %v41, %v46
    %49 = vst [vmem:[#allocation7] sm:$0xff] %v48
    // Predicated region
    $region14: #{tpu_custom_call.1} parent=1 // pred_check
      _
    $region15: #{tpu_custom_call.1} parent=1 // pred_check_branch
      %51 = sbr.rel (0) target = $region17
    $region16: #{tpu_custom_call.1} parent=1 // pred_region
      %s53 = ssub.s32 128, 128
      %54 = vsyncadd [#allocation6], %s53
      %s56 = sshll.u32 [#allocation7], 4
      %s57 = int_to_ptr.vmem [resolvable:$true] %s56
      %59 = dma.vmem_to_hbm [thread:$0]  %s57, 128, %s3, [#allocation6]
    $region17: #{tpu_custom_call.1} parent=1 // pred_fallthru
      _
    // Predicated region
    $region18: #{tpu_custom_call.1} parent=1 // pred_check
      _
    $region19: #{tpu_custom_call.1} parent=1 // pred_check_branch
      %61 = sbr.rel (0) target = $region21
    $region20: #{tpu_custom_call.1} parent=1 // pred_region
      %62 = dma.done [#allocation6], 128
    $region21: #{tpu_custom_call.1} parent=1 // pred_fallthru
      _
    %63 = vsyncpa [#allocation5], 1
    %64 = vsyncpa [#allocation6], 1

</llo_original>
